<compile_context>
chip_gen: v6e
topology: v6e:2x2x1
jax: 0.10.0
libtpu: 0.0.40
codegen_flags: <defaults>
</compile_context>

<pallas_src>
import numpy as np
import jax
import jax.numpy as jnp
from jax.experimental import pallas as pl
from jax.experimental.pallas import tpu as pltpu

# ----------------------------- static sizes ---------------------------------
BATCH      = 2
NUM_BETAS  = 10
NUM_FACES  = 64
PW_DIM     = 20                        # part_widths
BL_DIM     = 24                        # bone_len
S2M_IN     = PW_DIM + BL_DIM           # 44
S2M_HID    = 48
S2M_OUT    = 3
NUM_ATTR   = 15                        # per-gender attribute count
POLY_FEATS = 2 * NUM_BETAS             # 20
NUM_PRED   = 2 + 3 + 2 * NUM_ATTR      # 35
DENSITY    = 985.0                     # body density used for mass

# block-diagonal weight slabs
WA_ROWS = NUM_BETAS + S2M_IN           # 54  (in:  beta | part_widths | bone_len)
WA_COLS = NUM_BETAS + S2M_HID          # 58  (out: x    | s2m hidden)
WB_ROWS = POLY_FEATS + S2M_HID         # 68  (in:  x_inp | x_inp^2 | h)
WB_COLS = 2 * NUM_ATTR + S2M_OUT       # 33  (out: attr_male|attr_female | meas)

R_MISC  = 56                           # 8-aligned row: [bias_A; bias_B; lw]
PA_ROWS, PA_COLS = 64, 64              # param slab A (W_A + biases + loss wts)
OUT_COLS = 128                         # lane-dense output width


# ------------------------------ Pallas kernel --------------------------------
def shapy_loss_kernel(beta_ref, pw_ref, bl_ref, gt_ref, w_ref, tri_ref,
                      pa_ref, wb_ref, out_ref):
    f32 = jnp.float32
    bsz = beta_ref.shape[0]

    beta = beta_ref[...]                                  # [B, 10]
    pw   = pw_ref[...]                                    # [B, 20]
    bl   = bl_ref[...]                                    # [B, 24]
    gt   = gt_ref[...]                                    # [B, 35]
    w    = w_ref[...]                                     # [B, 35]

    # ---- constant parameter slabs (static, lane-0-aligned views) ----
    wa   = pa_ref[0:WA_ROWS, 0:WA_COLS]                   # [54, 58] blockdiag(wconv, w1)
    misc = pa_ref[R_MISC:R_MISC + 3, :]                   # [3, 64]
    ba   = misc[0:1, 0:WA_COLS]                           # [1, 58]  bconv | b1
    bb   = misc[1:2, 0:WB_COLS]                           # [1, 33]  bm | bf | b2
    lw   = misc[2:3, 0:NUM_PRED]                          # [1, 35]  loss weights
    wb   = wb_ref[...]                                    # [68, 33] blockdiag(wmf, w2)

    # ---- MXU pass 1: beta converter + s2m hidden layer (block-diagonal) ----
    in1  = jnp.concatenate([beta, pw, bl], axis=1)        # [B, 54]
    out1 = jnp.dot(in1, wa, preferred_element_type=f32) + ba          # [B, 58]
    x     = out1[:, 0:NUM_BETAS]                          # SMPL-X betas (unclipped)
    x_inp = jnp.clip(x, -10.0, 10.0)
    h     = jnp.maximum(out1[:, NUM_BETAS:NUM_BETAS + S2M_HID], 0.0)  # [B, 48]

    # ---- body measurements (mass + height) from triangles [B, F, 9] ----
    tri = tri_ref[...]
    v0x = tri[:, :, 0:1]; v0y = tri[:, :, 1:2]; v0z = tri[:, :, 2:3]
    v1x = tri[:, :, 3:4]; v1y = tri[:, :, 4:5]; v1z = tri[:, :, 5:6]
    v2x = tri[:, :, 6:7]; v2y = tri[:, :, 7:8]; v2z = tri[:, :, 8:9]
    det = (v0x * (v1y * v2z - v1z * v2y)
           - v0y * (v1x * v2z - v1z * v2x)
           + v0z * (v1x * v2y - v1y * v2x))               # [B, F, 1]
    vol = jnp.sum(det, axis=1, keepdims=True) / 6.0       # [B, 1, 1]
    mass = jnp.abs(vol)[:, :, 0] * DENSITY                # [B, 1]
    # TODO(synk): real BodyMeasurements uses YAML-defined barycentric landmark
    # points for height; synthetic proxy = |y-centroid(face0) - y-centroid(face1)|.
    c0y = (v0y[:, 0:1, :] + v1y[:, 0:1, :] + v2y[:, 0:1, :]) / 3.0
    c1y = (v0y[:, 1:2, :] + v1y[:, 1:2, :] + v2y[:, 1:2, :]) / 3.0
    height = jnp.abs(c0y - c1y)[:, :, 0]                  # [B, 1]

    # ---- MXU pass 2: s2a male+female polynomials + s2m output layer ----
    in2  = jnp.concatenate([x_inp, x_inp * x_inp, h], axis=1)         # [B, 68]
    out2 = jnp.dot(in2, wb, preferred_element_type=f32) + bb          # [B, 33]
    attr_mf = jnp.clip(out2[:, 0:2 * NUM_ATTR], 0.0, 5.0)             # [B, 30]
    meas    = out2[:, 2 * NUM_ATTR:WB_COLS]                            # [B, 3]

    # ---- attr_pred assembled in registers (no partial stores / reload) ----
    attr_pred = jnp.concatenate([mass, height, meas, attr_mf], axis=1)  # [B, 35]

    # ---- weighted loss: fused loss_sum / w_sum reduction ----
    diff  = attr_pred - gt
    wloss = diff * diff * lw * w                                       # [B, 35]
    stacked   = jnp.concatenate([wloss, w], axis=0)                    # [2B, 35]
    lane_sums = jnp.sum(stacked, axis=1, keepdims=True)                # [2B, 1]
    loss_sum  = jnp.sum(lane_sums[0:bsz], axis=0, keepdims=True)       # (1, 1)
    w_sum     = jnp.sum(lane_sums[bsz:2 * bsz], axis=0, keepdims=True) # (1, 1)

    # ---- regularizers ----
    any_pos = jnp.max((w > 0.0).astype(f32), axis=1, keepdims=True)    # [B, 1]
    reg1 = jnp.sum(jnp.sum(jnp.square(x) * any_pos, axis=1, keepdims=True),
                   axis=0, keepdims=True) * (0.001 / float(bsz * NUM_BETAS))
    reg2 = (jnp.square(jnp.maximum(height - 3.0, 0.0))
            + jnp.square(jnp.maximum(0.6 - height, 0.0)))              # [B, 1]
    reg3 = (jnp.square(jnp.maximum(mass * 0.01 - 3.0, 0.0))
            + jnp.square(jnp.maximum(0.3 - mass * 0.01, 0.0)))         # [B, 1]
    reg = reg1 + jnp.sum(reg2 + reg3, axis=0, keepdims=True) / float(bsz)

    # guarded denominator (same result when w_sum > 0, avoids spurious inf/nan)
    loss = jnp.where(w_sum > 0.0,
                     loss_sum / jnp.maximum(w_sum, 1e-30) + reg,
                     loss_sum)                                         # (1, 1)

    # TODO(synk): per-row host-side debug print when loss/attr_w.sum() > 100 omitted.

    # ---- single lane-dense output: [attr_pred | loss | zero pad] -> [B, 128] ----
    loss_col = jnp.broadcast_to(loss, (bsz, 1))
    pad = jnp.zeros((bsz, OUT_COLS - NUM_PRED - 1), f32)
    out_ref[...] = jnp.concatenate([attr_pred, loss_col, pad], axis=1)


# --------------------------- host-side packing --------------------------------
def pack_params(p):
    """Pack parameters into two compact block-diagonal constant slabs (once)."""
    # slab A: blockdiag(wconv, w1) + [bias_A; bias_B; loss_weights]
    pa = jnp.zeros((PA_ROWS, PA_COLS), jnp.float32)
    pa = pa.at[0:NUM_BETAS, 0:NUM_BETAS].set(p["wconv"])
    pa = pa.at[NUM_BETAS:WA_ROWS, NUM_BETAS:WA_COLS].set(p["w1"])
    pa = pa.at[R_MISC, 0:NUM_BETAS].set(p["bconv"][0])
    pa = pa.at[R_MISC, NUM_BETAS:WA_COLS].set(p["b1"][0])
    pa = pa.at[R_MISC + 1, 0:NUM_ATTR].set(p["bm"][0])
    pa = pa.at[R_MISC + 1, NUM_ATTR:2 * NUM_ATTR].set(p["bf"][0])
    pa = pa.at[R_MISC + 1, 2 * NUM_ATTR:WB_COLS].set(p["b2"][0])
    lw = jnp.ones((NUM_PRED,), jnp.float32).at[0].set(0.03).at[1].set(10.0)
    pa = pa.at[R_MISC + 2, 0:NUM_PRED].set(lw)

    # slab B: blockdiag(wmf = [wm | wf], w2)
    wb = jnp.zeros((WB_ROWS, WB_COLS), jnp.float32)
    wb = wb.at[0:POLY_FEATS, 0:NUM_ATTR].set(p["wm"])
    wb = wb.at[0:POLY_FEATS, NUM_ATTR:2 * NUM_ATTR].set(p["wf"])
    wb = wb.at[POLY_FEATS:WB_ROWS, 2 * NUM_ATTR:WB_COLS].set(p["w2"])
    return pa, wb


# ------------------------------ wrapper --------------------------------------
@jax.jit
def _shapy_loss_jit(beta_smpl, triangles, part_widths, bone_len,
                    attr_gt, attr_w, param_a, param_b):
    b, nf = triangles.shape[0], triangles.shape[1]
    # free contiguous reshape only — no transpose, no data-slab packing
    tri = triangles.reshape(b, nf, 9)

    vmem = pl.BlockSpec(memory_space=pltpu.MemorySpace.VMEM)
    out = pl.pallas_call(
        shapy_loss_kernel,
        out_shape=jax.ShapeDtypeStruct((b, OUT_COLS), jnp.float32),
        in_specs=[vmem] * 8,
        out_specs=vmem,
    )(beta_smpl, part_widths, bone_len, attr_gt, attr_w, tri, param_a, param_b)

    loss = out[0, NUM_PRED]
    attr_pred = out[:, :NUM_PRED]
    return loss, attr_pred


def shapy_loss(beta_smpl, triangles, part_widths, bone_len, attr_gt, attr_w,
               packed_params, check_inputs=False):
    if check_inputs:
        # Original module's `assert (attr_w * attr_gt >= -1e-5).all()`.
        # Disabled by default: np.asarray forces a blocking device->host sync
        # which dominates this microsecond-scale kernel.
        assert bool(np.all(np.asarray(attr_w) * np.asarray(attr_gt) >= -1e-5))
    return _shapy_loss_jit(beta_smpl, triangles, part_widths, bone_len,
                           attr_gt, attr_w, *packed_params)


# ------------------------- pure-JAX reference --------------------------------
def shapy_loss_ref(beta_smpl, triangles, part_widths, bone_len, attr_gt, attr_w, p):
    hp = jax.lax.Precision.HIGHEST
    b = beta_smpl.shape[0]
    x = jnp.dot(beta_smpl, p["wconv"], precision=hp) + p["bconv"]
    x_inp = jnp.clip(x, -10.0, 10.0)
    tri = triangles.reshape(b, -1, 9)
    v0, v1, v2 = tri[..., 0:3], tri[..., 3:6], tri[..., 6:9]
    det = (v0[..., 0] * (v1[..., 1] * v2[..., 2] - v1[..., 2] * v2[..., 1])
           - v0[..., 1] * (v1[..., 0] * v2[..., 2] - v1[..., 2] * v2[..., 0])
           + v0[..., 2] * (v1[..., 0] * v2[..., 1] - v1[..., 1] * v2[..., 0]))
    mass = (jnp.abs(det.sum(-1) / 6.0) * DENSITY)[:, None]
    c0y = tri[:, 0, [1, 4, 7]].mean(-1)
    c1y = tri[:, 1, [1, 4, 7]].mean(-1)
    height = jnp.abs(c0y - c1y)[:, None]
    feats = jnp.concatenate([x_inp, x_inp**2], axis=1)
    am = jnp.clip(jnp.dot(feats, p["wm"], precision=hp) + p["bm"], 0.0, 5.0)
    af = jnp.clip(jnp.dot(feats, p["wf"], precision=hp) + p["bf"], 0.0, 5.0)
    s2m_in = jnp.concatenate([part_widths, bone_len], axis=1)
    h = jnp.maximum(jnp.dot(s2m_in, p["w1"], precision=hp) + p["b1"], 0.0)
    meas = jnp.dot(h, p["w2"], precision=hp) + p["b2"]
    attr_pred = jnp.concatenate(
        [mass, height, meas[:, 0:1], meas[:, 1:2], meas[:, 2:3], am, af], axis=1)
    lw = jnp.ones(NUM_PRED).at[0].set(0.03).at[1].set(10.0)
    loss = jnp.square(attr_pred - attr_gt) * lw * attr_w
    reg1 = jnp.square(x) * 0.001 * jnp.any(attr_w > 0, axis=-1, keepdims=True)
    reg2 = (jnp.square(jax.nn.relu(attr_pred[:, 1] - 3))
            + jnp.square(jax.nn.relu(0.6 - attr_pred[:, 1])))
    reg3 = (jnp.square(jax.nn.relu(attr_pred[:, 0] * 0.01 - 3))
            + jnp.square(jax.nn.relu(0.3 - attr_pred[:, 0] * 0.01)))
    reg = reg1.mean() + reg2.mean() + reg3.mean()
    total = jnp.where(attr_w.sum() > 0, loss.sum() / attr_w.sum() + reg, loss.sum())
    return total, attr_pred


# --------------------------------- main ---------------------------------------
if __name__ == "__main__":
    key = jax.random.PRNGKey(0)
    ks = jax.random.split(key, 16)

    # deterministic synthetic "checkpoint" parameters
    params = {
        "wconv": 0.3 * jax.random.normal(ks[0], (NUM_BETAS, NUM_BETAS), jnp.float32),
        "bconv": 0.05 * jax.random.normal(ks[1], (1, NUM_BETAS), jnp.float32),
        "wm":    0.1 * jax.random.normal(ks[2], (POLY_FEATS, NUM_ATTR), jnp.float32),
        "bm":    0.1 * jax.random.normal(ks[3], (1, NUM_ATTR), jnp.float32) + 2.0,
        "wf":    0.1 * jax.random.normal(ks[4], (POLY_FEATS, NUM_ATTR), jnp.float32),
        "bf":    0.1 * jax.random.normal(ks[5], (1, NUM_ATTR), jnp.float32) + 2.0,
        "w1":    0.2 * jax.random.normal(ks[6], (S2M_IN, S2M_HID), jnp.float32),
        "b1":    0.05 * jax.random.normal(ks[7], (1, S2M_HID), jnp.float32),
        "w2":    0.2 * jax.random.normal(ks[8], (S2M_HID, S2M_OUT), jnp.float32),
        "b2":    0.05 * jax.random.normal(ks[9], (1, S2M_OUT), jnp.float32),
    }
    packed_params = pack_params(params)        # packed once, reused every call

    beta_smpl   = 0.5 * jax.random.normal(ks[10], (BATCH, NUM_BETAS), jnp.float32)
    triangles   = 0.3 * jax.random.normal(ks[11], (BATCH, NUM_FACES, 3, 3), jnp.float32)
    part_widths = jnp.abs(0.2 * jax.random.normal(ks[12], (BATCH, PW_DIM), jnp.float32))
    bone_len    = jnp.abs(0.3 * jax.random.normal(ks[13], (BATCH, BL_DIM), jnp.float32))
    attr_gt     = jax.random.uniform(ks[14], (BATCH, NUM_PRED), jnp.float32, 0.0, 5.0)
    attr_w      = jax.random.uniform(ks[15], (BATCH, NUM_PRED), jnp.float32, 0.0, 1.0)

    loss, attr_pred = shapy_loss(beta_smpl, triangles, part_widths, bone_len,
                                 attr_gt, attr_w, packed_params)
    jax.block_until_ready((loss, attr_pred))

    loss_ref, attr_pred_ref = shapy_loss_ref(beta_smpl, triangles, part_widths,
                                             bone_len, attr_gt, attr_w, params)
    np.testing.assert_allclose(np.asarray(attr_pred), np.asarray(attr_pred_ref),
                               rtol=1e-3, atol=1e-3)
    np.testing.assert_allclose(float(loss), float(loss_ref), rtol=1e-3, atol=1e-3)

    print("KERNEL_OK")
</pallas_src>

<mosaic_0001>
module attributes {stable_mosaic.version = 11 : i64} {
  func.func @shapy_loss_kernel(%arg0: memref<2x10xf32, #tpu.memory_space<vmem>>, %arg1: memref<2x20xf32, #tpu.memory_space<vmem>>, %arg2: memref<2x24xf32, #tpu.memory_space<vmem>>, %arg3: memref<2x35xf32, #tpu.memory_space<vmem>>, %arg4: memref<2x35xf32, #tpu.memory_space<vmem>>, %arg5: memref<2x64x9xf32, #tpu.memory_space<vmem>>, %arg6: memref<64x64xf32, #tpu.memory_space<vmem>>, %arg7: memref<68x33xf32, #tpu.memory_space<vmem>>, %arg8: memref<2x128xf32, #tpu.memory_space<vmem>>) attributes {dimension_semantics = [], scalar_prefetch = 0 : i64, scratch_operands = 0 : i64, tpu.core_type = #tpu.core_type<tc>} {
    %c0 = arith.constant 0 : index
    %c0_0 = arith.constant 0 : index
    %0 = vector.load %arg0[%c0, %c0_0] : memref<2x10xf32, #tpu.memory_space<vmem>>, vector<2x10xf32>
    %c0_1 = arith.constant 0 : index
    %c0_2 = arith.constant 0 : index
    %1 = vector.load %arg1[%c0_1, %c0_2] : memref<2x20xf32, #tpu.memory_space<vmem>>, vector<2x20xf32>
    %c0_3 = arith.constant 0 : index
    %c0_4 = arith.constant 0 : index
    %2 = vector.load %arg2[%c0_3, %c0_4] : memref<2x24xf32, #tpu.memory_space<vmem>>, vector<2x24xf32>
    %c0_5 = arith.constant 0 : index
    %c0_6 = arith.constant 0 : index
    %3 = vector.load %arg3[%c0_5, %c0_6] : memref<2x35xf32, #tpu.memory_space<vmem>>, vector<2x35xf32>
    %c0_7 = arith.constant 0 : index
    %c0_8 = arith.constant 0 : index
    %4 = vector.load %arg4[%c0_7, %c0_8] : memref<2x35xf32, #tpu.memory_space<vmem>>, vector<2x35xf32>
    %c0_9 = arith.constant 0 : index
    %c0_10 = arith.constant 0 : index
    %5 = vector.load %arg6[%c0_9, %c0_10] : memref<64x64xf32, #tpu.memory_space<vmem>>, vector<54x58xf32>
    %c56 = arith.constant 56 : index
    %c0_11 = arith.constant 0 : index
    %6 = vector.load %arg6[%c56, %c0_11] : memref<64x64xf32, #tpu.memory_space<vmem>>, vector<3x64xf32>
    %7 = vector.extract_strided_slice %6 {offsets = [0, 0], sizes = [1, 58], strides = [1, 1]} : vector<3x64xf32> to vector<1x58xf32>
    %8 = vector.extract_strided_slice %6 {offsets = [1, 0], sizes = [1, 33], strides = [1, 1]} : vector<3x64xf32> to vector<1x33xf32>
    %9 = vector.extract_strided_slice %6 {offsets = [2, 0], sizes = [1, 35], strides = [1, 1]} : vector<3x64xf32> to vector<1x35xf32>
    %c0_12 = arith.constant 0 : index
    %c0_13 = arith.constant 0 : index
    %10 = vector.load %arg7[%c0_12, %c0_13] : memref<68x33xf32, #tpu.memory_space<vmem>>, vector<68x33xf32>
    %11 = tpu.concatenate %0, %1, %2 in 1 : vector<2x10xf32>, vector<2x20xf32>, vector<2x24xf32> -> vector<2x54xf32>
    %cst = arith.constant dense<0.000000e+00> : vector<2x58xf32>
    %12 = tpu.matmul %11, %5, %cst {dimension_numbers = #tpu.dot_dimension_numbers<[1], [0], [0], [1], [0, 0, 1, 1], [], []>} : vector<2x54xf32>, vector<54x58xf32>, vector<2x58xf32> -> vector<2x58xf32>
    %13 = vector.broadcast %7 : vector<1x58xf32> to vector<2x58xf32>
    %14 = arith.addf %12, %13 : vector<2x58xf32>
    %15 = vector.extract_strided_slice %14 {offsets = [0, 0], sizes = [2, 10], strides = [1, 1]} : vector<2x58xf32> to vector<2x10xf32>
    %cst_14 = arith.constant -1.000000e+01 : f32
    %cst_15 = arith.constant 1.000000e+01 : f32
    %16 = vector.broadcast %cst_14 : f32 to vector<2x10xf32>
    %17 = arith.maximumf %16, %15 : vector<2x10xf32>
    %18 = vector.broadcast %cst_15 : f32 to vector<2x10xf32>
    %19 = arith.minimumf %18, %17 : vector<2x10xf32>
    %20 = vector.extract_strided_slice %14 {offsets = [0, 10], sizes = [2, 48], strides = [1, 1]} : vector<2x58xf32> to vector<2x48xf32>
    %cst_16 = arith.constant 0.000000e+00 : f32
    %21 = vector.broadcast %cst_16 : f32 to vector<2x48xf32>
    %22 = arith.maximumf %20, %21 : vector<2x48xf32>
    %c0_17 = arith.constant 0 : index
    %c0_18 = arith.constant 0 : index
    %c0_19 = arith.constant 0 : index
    %23 = vector.load %arg5[%c0_17, %c0_18, %c0_19] : memref<2x64x9xf32, #tpu.memory_space<vmem>>, vector<2x64x9xf32>
    %24 = vector.extract_strided_slice %23 {offsets = [0, 0, 0], sizes = [2, 64, 1], strides = [1, 1, 1]} : vector<2x64x9xf32> to vector<2x64x1xf32>
    %25 = vector.extract_strided_slice %23 {offsets = [0, 0, 1], sizes = [2, 64, 1], strides = [1, 1, 1]} : vector<2x64x9xf32> to vector<2x64x1xf32>
    %26 = vector.extract_strided_slice %23 {offsets = [0, 0, 2], sizes = [2, 64, 1], strides = [1, 1, 1]} : vector<2x64x9xf32> to vector<2x64x1xf32>
    %27 = vector.extract_strided_slice %23 {offsets = [0, 0, 3], sizes = [2, 64, 1], strides = [1, 1, 1]} : vector<2x64x9xf32> to vector<2x64x1xf32>
    %28 = vector.extract_strided_slice %23 {offsets = [0, 0, 4], sizes = [2, 64, 1], strides = [1, 1, 1]} : vector<2x64x9xf32> to vector<2x64x1xf32>
    %29 = vector.extract_strided_slice %23 {offsets = [0, 0, 5], sizes = [2, 64, 1], strides = [1, 1, 1]} : vector<2x64x9xf32> to vector<2x64x1xf32>
    %30 = vector.extract_strided_slice %23 {offsets = [0, 0, 6], sizes = [2, 64, 1], strides = [1, 1, 1]} : vector<2x64x9xf32> to vector<2x64x1xf32>
    %31 = vector.extract_strided_slice %23 {offsets = [0, 0, 7], sizes = [2, 64, 1], strides = [1, 1, 1]} : vector<2x64x9xf32> to vector<2x64x1xf32>
    %32 = vector.extract_strided_slice %23 {offsets = [0, 0, 8], sizes = [2, 64, 1], strides = [1, 1, 1]} : vector<2x64x9xf32> to vector<2x64x1xf32>
    %33 = arith.mulf %28, %32 : vector<2x64x1xf32>
    %34 = arith.mulf %29, %31 : vector<2x64x1xf32>
    %35 = arith.subf %33, %34 : vector<2x64x1xf32>
    %36 = arith.mulf %24, %35 : vector<2x64x1xf32>
    %37 = arith.mulf %27, %32 : vector<2x64x1xf32>
    %38 = arith.mulf %29, %30 : vector<2x64x1xf32>
    %39 = arith.subf %37, %38 : vector<2x64x1xf32>
    %40 = arith.mulf %25, %39 : vector<2x64x1xf32>
    %41 = arith.subf %36, %40 : vector<2x64x1xf32>
    %42 = arith.mulf %27, %31 : vector<2x64x1xf32>
    %43 = arith.mulf %28, %30 : vector<2x64x1xf32>
    %44 = arith.subf %42, %43 : vector<2x64x1xf32>
    %45 = arith.mulf %26, %44 : vector<2x64x1xf32>
    %46 = arith.addf %41, %45 : vector<2x64x1xf32>
    %cst_20 = arith.constant dense<0.000000e+00> : vector<2x1xf32>
    %47 = vector.multi_reduction <add>, %46, %cst_20 [1] : vector<2x64x1xf32> to vector<2x1xf32>
    %48 = vector.shape_cast %47 : vector<2x1xf32> to vector<2x1x1xf32>
    %cst_21 = arith.constant 6.000000e+00 : f32
    %49 = vector.broadcast %cst_21 : f32 to vector<2x1x1xf32>
    %50 = arith.divf %48, %49 : vector<2x1x1xf32>
    %51 = math.absf %50 : vector<2x1x1xf32>
    %52 = vector.shape_cast %51 : vector<2x1x1xf32> to vector<2x1xf32>
    %cst_22 = arith.constant 9.850000e+02 : f32
    %53 = vector.broadcast %cst_22 : f32 to vector<2x1xf32>
    %54 = arith.mulf %52, %53 : vector<2x1xf32>
    %55 = vector.extract_strided_slice %25 {offsets = [0, 0, 0], sizes = [2, 1, 1], strides = [1, 1, 1]} : vector<2x64x1xf32> to vector<2x1x1xf32>
    %56 = vector.extract_strided_slice %28 {offsets = [0, 0, 0], sizes = [2, 1, 1], strides = [1, 1, 1]} : vector<2x64x1xf32> to vector<2x1x1xf32>
    %57 = arith.addf %55, %56 : vector<2x1x1xf32>
    %58 = vector.extract_strided_slice %31 {offsets = [0, 0, 0], sizes = [2, 1, 1], strides = [1, 1, 1]} : vector<2x64x1xf32> to vector<2x1x1xf32>
    %59 = arith.addf %57, %58 : vector<2x1x1xf32>
    %cst_23 = arith.constant 3.000000e+00 : f32
    %60 = vector.broadcast %cst_23 : f32 to vector<2x1x1xf32>
    %61 = arith.divf %59, %60 : vector<2x1x1xf32>
    %62 = vector.extract_strided_slice %25 {offsets = [0, 1, 0], sizes = [2, 1, 1], strides = [1, 1, 1]} : vector<2x64x1xf32> to vector<2x1x1xf32>
    %63 = vector.extract_strided_slice %28 {offsets = [0, 1, 0], sizes = [2, 1, 1], strides = [1, 1, 1]} : vector<2x64x1xf32> to vector<2x1x1xf32>
    %64 = arith.addf %62, %63 : vector<2x1x1xf32>
    %65 = vector.extract_strided_slice %31 {offsets = [0, 1, 0], sizes = [2, 1, 1], strides = [1, 1, 1]} : vector<2x64x1xf32> to vector<2x1x1xf32>
    %66 = arith.addf %64, %65 : vector<2x1x1xf32>
    %cst_24 = arith.constant 3.000000e+00 : f32
    %67 = vector.broadcast %cst_24 : f32 to vector<2x1x1xf32>
    %68 = arith.divf %66, %67 : vector<2x1x1xf32>
    %69 = arith.subf %61, %68 : vector<2x1x1xf32>
    %70 = math.absf %69 : vector<2x1x1xf32>
    %71 = vector.shape_cast %70 : vector<2x1x1xf32> to vector<2x1xf32>
    %72 = arith.mulf %19, %19 : vector<2x10xf32>
    %73 = tpu.concatenate %19, %72, %22 in 1 : vector<2x10xf32>, vector<2x10xf32>, vector<2x48xf32> -> vector<2x68xf32>
    %cst_25 = arith.constant dense<0.000000e+00> : vector<2x33xf32>
    %74 = tpu.matmul %73, %10, %cst_25 {dimension_numbers = #tpu.dot_dimension_numbers<[1], [0], [0], [1], [0, 0, 1, 1], [], []>} : vector<2x68xf32>, vector<68x33xf32>, vector<2x33xf32> -> vector<2x33xf32>
    %75 = vector.broadcast %8 : vector<1x33xf32> to vector<2x33xf32>
    %76 = arith.addf %74, %75 : vector<2x33xf32>
    %77 = vector.extract_strided_slice %76 {offsets = [0, 0], sizes = [2, 30], strides = [1, 1]} : vector<2x33xf32> to vector<2x30xf32>
    %cst_26 = arith.constant 0.000000e+00 : f32
    %cst_27 = arith.constant 5.000000e+00 : f32
    %78 = vector.broadcast %cst_26 : f32 to vector<2x30xf32>
    %79 = arith.maximumf %78, %77 : vector<2x30xf32>
    %80 = vector.broadcast %cst_27 : f32 to vector<2x30xf32>
    %81 = arith.minimumf %80, %79 : vector<2x30xf32>
    %82 = vector.extract_strided_slice %76 {offsets = [0, 30], sizes = [2, 3], strides = [1, 1]} : vector<2x33xf32> to vector<2x3xf32>
    %83 = tpu.concatenate %54, %71, %82, %81 in 1 : vector<2x1xf32>, vector<2x1xf32>, vector<2x3xf32>, vector<2x30xf32> -> vector<2x35xf32>
    %84 = arith.subf %83, %3 : vector<2x35xf32>
    %85 = arith.mulf %84, %84 : vector<2x35xf32>
    %86 = vector.broadcast %9 : vector<1x35xf32> to vector<2x35xf32>
    %87 = arith.mulf %85, %86 : vector<2x35xf32>
    %88 = arith.mulf %87, %4 : vector<2x35xf32>
    %89 = tpu.concatenate %88, %4 in 0 : vector<2x35xf32>, vector<2x35xf32> -> vector<4x35xf32>
    %cst_28 = arith.constant dense<0.000000e+00> : vector<4xf32>
    %90 = vector.multi_reduction <add>, %89, %cst_28 [1] : vector<4x35xf32> to vector<4xf32>
    %91 = vector.shape_cast %90 : vector<4xf32> to vector<4x1xf32>
    %92 = vector.extract_strided_slice %91 {offsets = [0, 0], sizes = [2, 1], strides = [1, 1]} : vector<4x1xf32> to vector<2x1xf32>
    %cst_29 = arith.constant dense<0.000000e+00> : vector<1xf32>
    %93 = vector.multi_reduction <add>, %92, %cst_29 [0] : vector<2x1xf32> to vector<1xf32>
    %94 = vector.shape_cast %93 : vector<1xf32> to vector<1x1xf32>
    %95 = vector.extract_strided_slice %91 {offsets = [2, 0], sizes = [2, 1], strides = [1, 1]} : vector<4x1xf32> to vector<2x1xf32>
    %cst_30 = arith.constant dense<0.000000e+00> : vector<1xf32>
    %96 = vector.multi_reduction <add>, %95, %cst_30 [0] : vector<2x1xf32> to vector<1xf32>
    %97 = vector.shape_cast %96 : vector<1xf32> to vector<1x1xf32>
    %cst_31 = arith.constant 0.000000e+00 : f32
    %98 = vector.broadcast %cst_31 : f32 to vector<2x35xf32>
    %99 = arith.cmpf ogt, %4, %98 : vector<2x35xf32>
    %100 = arith.extui %99 : vector<2x35xi1> to vector<2x35xi32>
    %101 = arith.sitofp %100 : vector<2x35xi32> to vector<2x35xf32>
    %cst_32 = arith.constant dense<0xFF800000> : vector<2xf32>
    %102 = vector.multi_reduction <maximumf>, %101, %cst_32 [1] : vector<2x35xf32> to vector<2xf32>
    %103 = vector.shape_cast %102 : vector<2xf32> to vector<2x1xf32>
    %104 = arith.mulf %15, %15 : vector<2x10xf32>
    %105 = vector.broadcast %103 : vector<2x1xf32> to vector<2x10xf32>
    %106 = arith.mulf %104, %105 : vector<2x10xf32>
    %cst_33 = arith.constant dense<0.000000e+00> : vector<2xf32>
    %107 = vector.multi_reduction <add>, %106, %cst_33 [1] : vector<2x10xf32> to vector<2xf32>
    %108 = vector.shape_cast %107 : vector<2xf32> to vector<2x1xf32>
    %cst_34 = arith.constant dense<0.000000e+00> : vector<1xf32>
    %109 = vector.multi_reduction <add>, %108, %cst_34 [0] : vector<2x1xf32> to vector<1xf32>
    %110 = vector.shape_cast %109 : vector<1xf32> to vector<1x1xf32>
    %cst_35 = arith.constant 5.000000e-05 : f32
    %111 = vector.broadcast %cst_35 : f32 to vector<1x1xf32>
    %112 = arith.mulf %110, %111 : vector<1x1xf32>
    %cst_36 = arith.constant 3.000000e+00 : f32
    %113 = vector.broadcast %cst_36 : f32 to vector<2x1xf32>
    %114 = arith.subf %71, %113 : vector<2x1xf32>
    %cst_37 = arith.constant 0.000000e+00 : f32
    %115 = vector.broadcast %cst_37 : f32 to vector<2x1xf32>
    %116 = arith.maximumf %114, %115 : vector<2x1xf32>
    %117 = arith.mulf %116, %116 : vector<2x1xf32>
    %cst_38 = arith.constant 6.000000e-01 : f32
    %118 = vector.broadcast %cst_38 : f32 to vector<2x1xf32>
    %119 = arith.subf %118, %71 : vector<2x1xf32>
    %cst_39 = arith.constant 0.000000e+00 : f32
    %120 = vector.broadcast %cst_39 : f32 to vector<2x1xf32>
    %121 = arith.maximumf %119, %120 : vector<2x1xf32>
    %122 = arith.mulf %121, %121 : vector<2x1xf32>
    %123 = arith.addf %117, %122 : vector<2x1xf32>
    %cst_40 = arith.constant 0.00999999977 : f32
    %124 = vector.broadcast %cst_40 : f32 to vector<2x1xf32>
    %125 = arith.mulf %54, %124 : vector<2x1xf32>
    %cst_41 = arith.constant 3.000000e+00 : f32
    %126 = vector.broadcast %cst_41 : f32 to vector<2x1xf32>
    %127 = arith.subf %125, %126 : vector<2x1xf32>
    %cst_42 = arith.constant 0.000000e+00 : f32
    %128 = vector.broadcast %cst_42 : f32 to vector<2x1xf32>
    %129 = arith.maximumf %127, %128 : vector<2x1xf32>
    %130 = arith.mulf %129, %129 : vector<2x1xf32>
    %cst_43 = arith.constant 0.00999999977 : f32
    %131 = vector.broadcast %cst_43 : f32 to vector<2x1xf32>
    %132 = arith.mulf %54, %131 : vector<2x1xf32>
    %cst_44 = arith.constant 3.000000e-01 : f32
    %133 = vector.broadcast %cst_44 : f32 to vector<2x1xf32>
    %134 = arith.subf %133, %132 : vector<2x1xf32>
    %cst_45 = arith.constant 0.000000e+00 : f32
    %135 = vector.broadcast %cst_45 : f32 to vector<2x1xf32>
    %136 = arith.maximumf %134, %135 : vector<2x1xf32>
    %137 = arith.mulf %136, %136 : vector<2x1xf32>
    %138 = arith.addf %130, %137 : vector<2x1xf32>
    %139 = arith.addf %123, %138 : vector<2x1xf32>
    %cst_46 = arith.constant dense<0.000000e+00> : vector<1xf32>
    %140 = vector.multi_reduction <add>, %139, %cst_46 [0] : vector<2x1xf32> to vector<1xf32>
    %141 = vector.shape_cast %140 : vector<1xf32> to vector<1x1xf32>
    %cst_47 = arith.constant 2.000000e+00 : f32
    %142 = vector.broadcast %cst_47 : f32 to vector<1x1xf32>
    %143 = arith.divf %141, %142 : vector<1x1xf32>
    %144 = arith.addf %112, %143 : vector<1x1xf32>
    %cst_48 = arith.constant 0.000000e+00 : f32
    %145 = vector.broadcast %cst_48 : f32 to vector<1x1xf32>
    %146 = arith.cmpf ogt, %97, %145 : vector<1x1xf32>
    %cst_49 = arith.constant 1.000000e-30 : f32
    %147 = vector.broadcast %cst_49 : f32 to vector<1x1xf32>
    %148 = arith.maximumf %97, %147 : vector<1x1xf32>
    %149 = arith.divf %94, %148 : vector<1x1xf32>
    %150 = arith.addf %149, %144 : vector<1x1xf32>
    %151 = arith.select %146, %150, %94 : vector<1x1xi1>, vector<1x1xf32>
    %152 = vector.shape_cast %151 : vector<1x1xf32> to vector<1x1xf32>
    %153 = vector.broadcast %152 : vector<1x1xf32> to vector<2x1xf32>
    %cst_50 = arith.constant 0.000000e+00 : f32
    %154 = vector.broadcast %cst_50 : f32 to vector<2x92xf32>
    %155 = tpu.concatenate %83, %153, %154 in 1 : vector<2x35xf32>, vector<2x1xf32>, vector<2x92xf32> -> vector<2x128xf32>
    %c0_51 = arith.constant 0 : index
    %c0_52 = arith.constant 0 : index
    %156 = vector.load %arg8[%c0_51, %c0_52] : memref<2x128xf32, #tpu.memory_space<vmem>>, vector<2x128xf32>
    tpu.vector_store %arg8[%c0_51, %c0_52], %155 {strides = array<i32>} : memref<2x128xf32, #tpu.memory_space<vmem>>, vector<2x128xf32>,
    return
  }
}

</mosaic_0001>

<llo_original>
// kernel: _shapy_loss_jit.1
$region0: #{_shapy_loss_jit.1}
  #allocation0 [shape = 'u32[]', space=smem, size = 0x4, offset = 0x4, fixed_abs, tag = 'smem constant byte address 0x4 - core index']
  #allocation1 [shape = 'u32[144,128]{1,0:T(1,128)}', space=vmem, size = 0x12000, scoped, tag = 'internal scratch']
  %s0 = inlined_call_operand.vmem [shape: f32[2,10], index: 0, kind: input, shape index: {}]
  %s1 = inlined_call_operand.vmem [shape: f32[2,20], index: 1, kind: input, shape index: {}]
  %s2 = inlined_call_operand.vmem [shape: f32[2,24], index: 2, kind: input, shape index: {}]
  %s3 = inlined_call_operand.vmem [shape: f32[2,35], index: 3, kind: input, shape index: {}]
  %s4 = inlined_call_operand.vmem [shape: f32[2,35], index: 4, kind: input, shape index: {}]
  %s5 = inlined_call_operand.vmem [shape: f32[2,64,9], index: 5, kind: input, shape index: {}]
  %s6 = inlined_call_operand.vmem [shape: f32[64,64], index: 6, kind: input, shape index: {}]
  %s7 = inlined_call_operand.vmem [shape: f32[68,33], index: 7, kind: input, shape index: {}]
  %s8 = inlined_call_operand.vmem [shape: f32[2,128], index: 8, kind: output, shape index: {}]
  %s9 = sld [smem:[#allocation0]]
  $region42: #{_shapy_loss_jit.1} parent=0
    _
  %s11 = ssub.s32 1, %s9
  %s12 = scalar_select 0, %s11, %s9
  // Predicated region
  $region2: #{_shapy_loss_jit.1} parent=0 // pred_check
    _
  $region3: #{_shapy_loss_jit.1} parent=0 // pred_check_branch
    %14 = sbr.rel (0) target = $region5
  $region4: #{_shapy_loss_jit.1} parent=0 // pred_region
    _
  $region5: #{_shapy_loss_jit.1} parent=0 // pred_fallthru
    _
  // Predicated region
  $region6: #{_shapy_loss_jit.1} parent=0 // pred_check
    _
  $region7: #{_shapy_loss_jit.1} parent=0 // pred_check_branch
    %16 = sbr.rel (0) target = $region9
  $region8: #{_shapy_loss_jit.1} parent=0 // pred_region
    _
  $region9: #{_shapy_loss_jit.1} parent=0 // pred_fallthru
    _
  // Predicated region
  $region10: #{_shapy_loss_jit.1} parent=0 // pred_check
    _
  $region11: #{_shapy_loss_jit.1} parent=0 // pred_check_branch
    %18 = sbr.rel (0) target = $region13
  $region12: #{_shapy_loss_jit.1} parent=0 // pred_region
    _
  $region13: #{_shapy_loss_jit.1} parent=0 // pred_fallthru
    _
  // Predicated region
  $region14: #{_shapy_loss_jit.1} parent=0 // pred_check
    _
  $region15: #{_shapy_loss_jit.1} parent=0 // pred_check_branch
    %20 = sbr.rel (0) target = $region17
  $region16: #{_shapy_loss_jit.1} parent=0 // pred_region
    _
  $region17: #{_shapy_loss_jit.1} parent=0 // pred_fallthru
    _
  // Predicated region
  $region18: #{_shapy_loss_jit.1} parent=0 // pred_check
    _
  $region19: #{_shapy_loss_jit.1} parent=0 // pred_check_branch
    %22 = sbr.rel (0) target = $region21
  $region20: #{_shapy_loss_jit.1} parent=0 // pred_region
    _
  $region21: #{_shapy_loss_jit.1} parent=0 // pred_fallthru
    _
  // Predicated region
  $region22: #{_shapy_loss_jit.1} parent=0 // pred_check
    _
  $region23: #{_shapy_loss_jit.1} parent=0 // pred_check_branch
    %24 = sbr.rel (0) target = $region25
  $region24: #{_shapy_loss_jit.1} parent=0 // pred_region
    _
  $region25: #{_shapy_loss_jit.1} parent=0 // pred_fallthru
    _
  // Predicated region
  $region26: #{_shapy_loss_jit.1} parent=0 // pred_check
    _
  $region27: #{_shapy_loss_jit.1} parent=0 // pred_check_branch
    %26 = sbr.rel (0) target = $region29
  $region28: #{_shapy_loss_jit.1} parent=0 // pred_region
    _
  $region29: #{_shapy_loss_jit.1} parent=0 // pred_fallthru
    _
  // Predicated region
  $region30: #{_shapy_loss_jit.1} parent=0 // pred_check
    _
  $region31: #{_shapy_loss_jit.1} parent=0 // pred_check_branch
    %28 = sbr.rel (0) target = $region33
  $region32: #{_shapy_loss_jit.1} parent=0 // pred_region
    _
  $region33: #{_shapy_loss_jit.1} parent=0 // pred_fallthru
    _
  %v29 = vld [vmem:[%s0] sm:$0x3]
  %v30 = vld [vmem:[%s1] sm:$0x3]
  %v31 = vld [vmem:[%s2] sm:$0x3]
  %v32 = vld [vmem:[%s3] sm:$0x3]
  %v33 = vld [vmem:[%s4] sm:$0x3]
  %v34 = vld [vmem:[%s6] sm:$0xff]
  %v35 = vld [vmem:[%s6 + $0x8] sm:$0xff]
  %v36 = vld [vmem:[%s6 + $0x10] sm:$0xff]
  %v37 = vld [vmem:[%s6 + $0x18] sm:$0xff]
  %v38 = vld [vmem:[%s6 + $0x20] sm:$0xff]
  %v39 = vld [vmem:[%s6 + $0x28] sm:$0xff]
  %v40 = vld [vmem:[%s6 + $0x30] sm:$0x3f]
  %v41 = vld [vmem:[%s6 + $0x38] sm:$0x7]
  %v42 = vld [vmem:[%s7] sm:$0xff]
  %v43 = vld [vmem:[%s7 + $0x8] sm:$0xff]
  %v44 = vld [vmem:[%s7 + $0x10] sm:$0xff]
  %v45 = vld [vmem:[%s7 + $0x18] sm:$0xff]
  %v46 = vld [vmem:[%s7 + $0x20] sm:$0xff]
  %v47 = vld [vmem:[%s7 + $0x28] sm:$0xff]
  %v48 = vld [vmem:[%s7 + $0x30] sm:$0xff]
  %v49 = vld [vmem:[%s7 + $0x38] sm:$0xff]
  %v50 = vld [vmem:[%s7 + $0x40] sm:$0xf]
  %52 = vrot.lane.b32.xlu0 %v30, 10
  %v53 = vpop.permute.xlu0 %52
  %56 = vrot.lane.b32.xlu0 %v31, 30
  %v57 = vpop.permute.xlu0 %56
  %vm59 = vcmask 80896
  %v60 = vsel %vm59, %v29, %v53
  %vm61 = vcmask 244736
  %v62 = vsel %vm61, %v60, %v57
  %v63 = vlaneseq
  %v64 = vshrl.u32 %v63, 7
  %v65 = vsub.s32 0, %v64
  %v66 = vrot.slane %v41, %v65
  %vm67 = vcmask 441344
  %v69 = vsel %vm67, %v62, 0
  %vm71 = vcmask 1045504
  %v73 = vsel %vm71, %v40, 0
  %75 = vmatprep.subr.mxu0 0.0
  %76 = vmatpush1.msra.mxu0 0.0
  %77 = vmatprep.subr.mxu0 0.0
  %78 = vmatpush1.msra.mxu0 0.0
  %79 = vmatprep.subr.mxu0 0.0
  %80 = vmatpush1.msra.mxu0 0.0
  %81 = vmatprep.subr.mxu0 0.0
  %82 = vmatpush1.msra.mxu0 0.0
  %83 = vmatprep.subr.mxu0 0.0
  %84 = vmatpush1.msra.mxu0 0.0
  %85 = vmatprep.subr.mxu0 0.0
  %86 = vmatpush1.msra.mxu0 0.0
  %87 = vmatprep.subr.mxu0 0.0
  %88 = vmatpush1.msra.mxu0 0.0
  %89 = vmatprep.subr.mxu0 0.0
  %90 = vmatpush1.msra.mxu0 0.0
  %91 = vmatprep.subr.mxu0 0.0
  %92 = vmatpush1.msra.mxu0 0.0
  %93 = vmatprep.subr.mxu0 0.0
  %94 = vmatpush1.msra.mxu0 %v73
  %95 = vmatprep.subr.mxu0 0.0
  %96 = vmatpush1.msra.mxu0 %v39
  %97 = vmatprep.subr.mxu0 0.0
  %98 = vmatpush1.msra.mxu0 %v38
  %99 = vmatprep.subr.mxu0 0.0
  %100 = vmatpush1.msra.mxu0 %v37
  %101 = vmatprep.subr.mxu0 0.0
  %102 = vmatpush1.msra.mxu0 %v36
  %103 = vmatprep.subr.mxu0 0.0
  %104 = vmatpush1.msra.mxu0 %v35
  %105 = vmatprep.subr.mxu0 0.0
  %106 = vmatpush1.msra.mxu0 %v34
  %107 = vmatprep.subr.mxu0 0.0
  %108 = vmatpush2.msra.mxu0 0.0
  %109 = vmatprep.subr.mxu0 0.0
  %110 = vmatpush2.msra.mxu0 0.0
  %111 = vmatprep.subr.mxu0 0.0
  %112 = vmatpush2.msra.mxu0 0.0
  %113 = vmatprep.subr.mxu0 0.0
  %114 = vmatpush2.msra.mxu0 0.0
  %115 = vmatprep.subr.mxu0 0.0
  %116 = vmatpush2.msra.mxu0 0.0
  %117 = vmatprep.subr.mxu0 0.0
  %118 = vmatpush2.msra.mxu0 0.0
  %119 = vmatprep.subr.mxu0 0.0
  %120 = vmatpush2.msra.mxu0 0.0
  %121 = vmatprep.subr.mxu0 0.0
  %122 = vmatpush2.msra.mxu0 0.0
  %123 = vmatprep.subr.mxu0 0.0
  %124 = vmatpush2.msra.mxu0 0.0
  %125 = vmatprep.subr.mxu0 0.0
  %126 = vmatpush2.msra.mxu0 0.0
  %127 = vmatprep.subr.mxu0 0.0
  %128 = vmatpush2.msra.mxu0 0.0
  %129 = vmatprep.subr.mxu0 0.0
  %130 = vmatpush2.msra.mxu0 0.0
  %131 = vmatprep.subr.mxu0 0.0
  %132 = vmatpush2.msra.mxu0 0.0
  %133 = vmatprep.subr.mxu0 0.0
  %134 = vmatpush2.msra.mxu0 0.0
  %135 = vmatprep.subr.mxu0 0.0
  %136 = vmatpush2.msra.mxu0 0.0
  %137 = vmatprep.subr.mxu0 0.0
  %138 = vmatpush2.msra.mxu0 0.0
  %139 = vmatprep.mubr.f32.mxu0 0.0
  %140 = vmatmul.mubr.f32.gmra.mxu0 %v69
  %v141 = vpop.f32.mrf.mxu0
  %v142 = vadd.f32 %v66, %v141
  %v143 = vpop.f32.mrf.mxu0
  %144 = vdwg.mxu0
  %v145 = vmax.f32 %v142, -10.0
  %v146 = vmin.f32 %v145, 10.0
  %v147 = vmax.f32 %v142, 0.0
  %v148 = vld [vmem:[%s5] sm:$0xff]
  %v149 = vld [vmem:[%s5 + $0x8] sm:$0xff]
  %v150 = vld [vmem:[%s5 + $0x10] sm:$0xff]
  %v151 = vld [vmem:[%s5 + $0x18] sm:$0xff]
  %v152 = vld [vmem:[%s5 + $0x20] sm:$0xff]
  %v153 = vld [vmem:[%s5 + $0x28] sm:$0xff]
  %v154 = vld [vmem:[%s5 + $0x30] sm:$0xff]
  %v155 = vld [vmem:[%s5 + $0x38] sm:$0xff]
  %v156 = vld [vmem:[%s5 + $0x40] sm:$0xff]
  %v157 = vld [vmem:[%s5 + $0x48] sm:$0xff]
  %v158 = vld [vmem:[%s5 + $0x50] sm:$0xff]
  %v159 = vld [vmem:[%s5 + $0x58] sm:$0xff]
  %v160 = vld [vmem:[%s5 + $0x60] sm:$0xff]
  %v161 = vld [vmem:[%s5 + $0x68] sm:$0xff]
  %v162 = vld [vmem:[%s5 + $0x70] sm:$0xff]
  %v163 = vld [vmem:[%s5 + $0x78] sm:$0xff]
  %180 = vrot.lane.b32.xlu0 %v148, 124
  %v181 = vpop.permute.xlu0 %180
  %182 = vrot.lane.b32.xlu0 %v149, 124
  %v183 = vpop.permute.xlu0 %182
  %184 = vrot.lane.b32.xlu0 %v150, 124
  %v185 = vpop.permute.xlu0 %184
  %186 = vrot.lane.b32.xlu0 %v151, 124
  %v187 = vpop.permute.xlu0 %186
  %188 = vrot.lane.b32.xlu0 %v152, 124
  %v189 = vpop.permute.xlu0 %188
  %190 = vrot.lane.b32.xlu0 %v153, 124
  %v191 = vpop.permute.xlu0 %190
  %192 = vrot.lane.b32.xlu0 %v154, 124
  %v193 = vpop.permute.xlu0 %192
  %194 = vrot.lane.b32.xlu0 %v155, 124
  %v195 = vpop.permute.xlu0 %194
  %196 = vrot.lane.b32.xlu0 %v156, 124
  %v197 = vpop.permute.xlu0 %196
  %198 = vrot.lane.b32.xlu0 %v157, 124
  %v199 = vpop.permute.xlu0 %198
  %200 = vrot.lane.b32.xlu0 %v158, 124
  %v201 = vpop.permute.xlu0 %200
  %202 = vrot.lane.b32.xlu0 %v159, 124
  %v203 = vpop.permute.xlu0 %202
  %204 = vrot.lane.b32.xlu0 %v160, 124
  %v205 = vpop.permute.xlu0 %204
  %206 = vrot.lane.b32.xlu0 %v161, 124
  %v207 = vpop.permute.xlu0 %206
  %208 = vrot.lane.b32.xlu0 %v162, 124
  %v209 = vpop.permute.xlu0 %208
  %210 = vrot.lane.b32.xlu0 %v163, 124
  %v211 = vpop.permute.xlu0 %210
  %v228 = vmul.f32 %v148, %v181
  %v229 = vmul.f32 %v149, %v183
  %v230 = vmul.f32 %v150, %v185
  %v231 = vmul.f32 %v151, %v187
  %v232 = vmul.f32 %v152, %v189
  %v233 = vmul.f32 %v153, %v191
  %v234 = vmul.f32 %v154, %v193
  %v235 = vmul.f32 %v155, %v195
  %v236 = vmul.f32 %v156, %v197
  %v237 = vmul.f32 %v157, %v199
  %v238 = vmul.f32 %v158, %v201
  %v239 = vmul.f32 %v159, %v203
  %v240 = vmul.f32 %v160, %v205
  %v241 = vmul.f32 %v161, %v207
  %v242 = vmul.f32 %v162, %v209
  %v243 = vmul.f32 %v163, %v211
  %244 = vrot.lane.b32.xlu0 %v148, 126
  %v245 = vpop.permute.xlu0 %244
  %246 = vrot.lane.b32.xlu0 %v149, 126
  %v247 = vpop.permute.xlu0 %246
  %248 = vrot.lane.b32.xlu0 %v150, 126
  %v249 = vpop.permute.xlu0 %248
  %250 = vrot.lane.b32.xlu0 %v151, 126
  %v251 = vpop.permute.xlu0 %250
  %252 = vrot.lane.b32.xlu0 %v152, 126
  %v253 = vpop.permute.xlu0 %252
  %254 = vrot.lane.b32.xlu0 %v153, 126
  %v255 = vpop.permute.xlu0 %254
  %256 = vrot.lane.b32.xlu0 %v154, 126
  %v257 = vpop.permute.xlu0 %256
  %258 = vrot.lane.b32.xlu0 %v155, 126
  %v259 = vpop.permute.xlu0 %258
  %260 = vrot.lane.b32.xlu0 %v156, 126
  %v261 = vpop.permute.xlu0 %260
  %262 = vrot.lane.b32.xlu0 %v157, 126
  %v263 = vpop.permute.xlu0 %262
  %264 = vrot.lane.b32.xlu0 %v158, 126
  %v265 = vpop.permute.xlu0 %264
  %266 = vrot.lane.b32.xlu0 %v159, 126
  %v267 = vpop.permute.xlu0 %266
  %268 = vrot.lane.b32.xlu0 %v160, 126
  %v269 = vpop.permute.xlu0 %268
  %270 = vrot.lane.b32.xlu0 %v161, 126
  %v271 = vpop.permute.xlu0 %270
  %272 = vrot.lane.b32.xlu0 %v162, 126
  %v273 = vpop.permute.xlu0 %272
  %274 = vrot.lane.b32.xlu0 %v163, 126
  %v275 = vpop.permute.xlu0 %274
  %v292 = vmul.f32 %v148, %v245
  %v293 = vmul.f32 %v149, %v247
  %v294 = vmul.f32 %v150, %v249
  %v295 = vmul.f32 %v151, %v251
  %v296 = vmul.f32 %v152, %v253
  %v297 = vmul.f32 %v153, %v255
  %v298 = vmul.f32 %v154, %v257
  %v299 = vmul.f32 %v155, %v259
  %v300 = vmul.f32 %v156, %v261
  %v301 = vmul.f32 %v157, %v263
  %v302 = vmul.f32 %v158, %v265
  %v303 = vmul.f32 %v159, %v267
  %v304 = vmul.f32 %v160, %v269
  %v305 = vmul.f32 %v161, %v271
  %v306 = vmul.f32 %v162, %v273
  %v307 = vmul.f32 %v163, %v275
  %324 = vrot.lane.b32.xlu0 %v292, 127
  %v325 = vpop.permute.xlu0 %324
  %326 = vrot.lane.b32.xlu0 %v293, 127
  %v327 = vpop.permute.xlu0 %326
  %328 = vrot.lane.b32.xlu0 %v294, 127
  %v329 = vpop.permute.xlu0 %328
  %330 = vrot.lane.b32.xlu0 %v295, 127
  %v331 = vpop.permute.xlu0 %330
  %332 = vrot.lane.b32.xlu0 %v296, 127
  %v333 = vpop.permute.xlu0 %332
  %334 = vrot.lane.b32.xlu0 %v297, 127
  %v335 = vpop.permute.xlu0 %334
  %336 = vrot.lane.b32.xlu0 %v298, 127
  %v337 = vpop.permute.xlu0 %336
  %338 = vrot.lane.b32.xlu0 %v299, 127
  %v339 = vpop.permute.xlu0 %338
  %340 = vrot.lane.b32.xlu0 %v300, 127
  %v341 = vpop.permute.xlu0 %340
  %342 = vrot.lane.b32.xlu0 %v301, 127
  %v343 = vpop.permute.xlu0 %342
  %344 = vrot.lane.b32.xlu0 %v302, 127
  %v345 = vpop.permute.xlu0 %344
  %346 = vrot.lane.b32.xlu0 %v303, 127
  %v347 = vpop.permute.xlu0 %346
  %348 = vrot.lane.b32.xlu0 %v304, 127
  %v349 = vpop.permute.xlu0 %348
  %350 = vrot.lane.b32.xlu0 %v305, 127
  %v351 = vpop.permute.xlu0 %350
  %352 = vrot.lane.b32.xlu0 %v306, 127
  %v353 = vpop.permute.xlu0 %352
  %354 = vrot.lane.b32.xlu0 %v307, 127
  %v355 = vpop.permute.xlu0 %354
  %v372 = vsub.f32 %v228, %v325
  %v373 = vsub.f32 %v229, %v327
  %v374 = vsub.f32 %v230, %v329
  %v375 = vsub.f32 %v231, %v331
  %v376 = vsub.f32 %v232, %v333
  %v377 = vsub.f32 %v233, %v335
  %v378 = vsub.f32 %v234, %v337
  %v379 = vsub.f32 %v235, %v339
  %v380 = vsub.f32 %v236, %v341
  %v381 = vsub.f32 %v237, %v343
  %v382 = vsub.f32 %v238, %v345
  %v383 = vsub.f32 %v239, %v347
  %v384 = vsub.f32 %v240, %v349
  %v385 = vsub.f32 %v241, %v351
  %v386 = vsub.f32 %v242, %v353
  %v387 = vsub.f32 %v243, %v355
  %404 = vrot.lane.b32.xlu0 %v372, 124
  %v405 = vpop.permute.xlu0 %404
  %406 = vrot.lane.b32.xlu0 %v373, 124
  %v407 = vpop.permute.xlu0 %406
  %408 = vrot.lane.b32.xlu0 %v374, 124
  %v409 = vpop.permute.xlu0 %408
  %410 = vrot.lane.b32.xlu0 %v375, 124
  %v411 = vpop.permute.xlu0 %410
  %412 = vrot.lane.b32.xlu0 %v376, 124
  %v413 = vpop.permute.xlu0 %412
  %414 = vrot.lane.b32.xlu0 %v377, 124
  %v415 = vpop.permute.xlu0 %414
  %416 = vrot.lane.b32.xlu0 %v378, 124
  %v417 = vpop.permute.xlu0 %416
  %418 = vrot.lane.b32.xlu0 %v379, 124
  %v419 = vpop.permute.xlu0 %418
  %420 = vrot.lane.b32.xlu0 %v380, 124
  %v421 = vpop.permute.xlu0 %420
  %422 = vrot.lane.b32.xlu0 %v381, 124
  %v423 = vpop.permute.xlu0 %422
  %424 = vrot.lane.b32.xlu0 %v382, 124
  %v425 = vpop.permute.xlu0 %424
  %426 = vrot.lane.b32.xlu0 %v383, 124
  %v427 = vpop.permute.xlu0 %426
  %428 = vrot.lane.b32.xlu0 %v384, 124
  %v429 = vpop.permute.xlu0 %428
  %430 = vrot.lane.b32.xlu0 %v385, 124
  %v431 = vpop.permute.xlu0 %430
  %432 = vrot.lane.b32.xlu0 %v386, 124
  %v433 = vpop.permute.xlu0 %432
  %434 = vrot.lane.b32.xlu0 %v387, 124
  %v435 = vpop.permute.xlu0 %434
  %v452 = vmul.f32 %v148, %v405
  %v453 = vmul.f32 %v149, %v407
  %v454 = vmul.f32 %v150, %v409
  %v455 = vmul.f32 %v151, %v411
  %v456 = vmul.f32 %v152, %v413
  %v457 = vmul.f32 %v153, %v415
  %v458 = vmul.f32 %v154, %v417
  %v459 = vmul.f32 %v155, %v419
  %v460 = vmul.f32 %v156, %v421
  %v461 = vmul.f32 %v157, %v423
  %v462 = vmul.f32 %v158, %v425
  %v463 = vmul.f32 %v159, %v427
  %v464 = vmul.f32 %v160, %v429
  %v465 = vmul.f32 %v161, %v431
  %v466 = vmul.f32 %v162, %v433
  %v467 = vmul.f32 %v163, %v435
  %468 = vrot.lane.b32.xlu0 %v148, 123
  %v469 = vpop.permute.xlu0 %468
  %470 = vrot.lane.b32.xlu0 %v149, 123
  %v471 = vpop.permute.xlu0 %470
  %472 = vrot.lane.b32.xlu0 %v150, 123
  %v473 = vpop.permute.xlu0 %472
  %474 = vrot.lane.b32.xlu0 %v151, 123
  %v475 = vpop.permute.xlu0 %474
  %476 = vrot.lane.b32.xlu0 %v152, 123
  %v477 = vpop.permute.xlu0 %476
  %478 = vrot.lane.b32.xlu0 %v153, 123
  %v479 = vpop.permute.xlu0 %478
  %480 = vrot.lane.b32.xlu0 %v154, 123
  %v481 = vpop.permute.xlu0 %480
  %482 = vrot.lane.b32.xlu0 %v155, 123
  %v483 = vpop.permute.xlu0 %482
  %484 = vrot.lane.b32.xlu0 %v156, 123
  %v485 = vpop.permute.xlu0 %484
  %486 = vrot.lane.b32.xlu0 %v157, 123
  %v487 = vpop.permute.xlu0 %486
  %488 = vrot.lane.b32.xlu0 %v158, 123
  %v489 = vpop.permute.xlu0 %488
  %490 = vrot.lane.b32.xlu0 %v159, 123
  %v491 = vpop.permute.xlu0 %490
  %492 = vrot.lane.b32.xlu0 %v160, 123
  %v493 = vpop.permute.xlu0 %492
  %494 = vrot.lane.b32.xlu0 %v161, 123
  %v495 = vpop.permute.xlu0 %494
  %496 = vrot.lane.b32.xlu0 %v162, 123
  %v497 = vpop.permute.xlu0 %496
  %498 = vrot.lane.b32.xlu0 %v163, 123
  %v499 = vpop.permute.xlu0 %498
  %v516 = vmul.f32 %v148, %v469
  %v517 = vmul.f32 %v149, %v471
  %v518 = vmul.f32 %v150, %v473
  %v519 = vmul.f32 %v151, %v475
  %v520 = vmul.f32 %v152, %v477
  %v521 = vmul.f32 %v153, %v479
  %v522 = vmul.f32 %v154, %v481
  %v523 = vmul.f32 %v155, %v483
  %v524 = vmul.f32 %v156, %v485
  %v525 = vmul.f32 %v157, %v487
  %v526 = vmul.f32 %v158, %v489
  %v527 = vmul.f32 %v159, %v491
  %v528 = vmul.f32 %v160, %v493
  %v529 = vmul.f32 %v161, %v495
  %v530 = vmul.f32 %v162, %v497
  %v531 = vmul.f32 %v163, %v499
  %532 = vrot.lane.b32.xlu0 %v148, 127
  %v533 = vpop.permute.xlu0 %532
  %534 = vrot.lane.b32.xlu0 %v149, 127
  %v535 = vpop.permute.xlu0 %534
  %536 = vrot.lane.b32.xlu0 %v150, 127
  %v537 = vpop.permute.xlu0 %536
  %538 = vrot.lane.b32.xlu0 %v151, 127
  %v539 = vpop.permute.xlu0 %538
  %540 = vrot.lane.b32.xlu0 %v152, 127
  %v541 = vpop.permute.xlu0 %540
  %542 = vrot.lane.b32.xlu0 %v153, 127
  %v543 = vpop.permute.xlu0 %542
  %544 = vrot.lane.b32.xlu0 %v154, 127
  %v545 = vpop.permute.xlu0 %544
  %546 = vrot.lane.b32.xlu0 %v155, 127
  %v547 = vpop.permute.xlu0 %546
  %548 = vrot.lane.b32.xlu0 %v156, 127
  %v549 = vpop.permute.xlu0 %548
  %550 = vrot.lane.b32.xlu0 %v157, 127
  %v551 = vpop.permute.xlu0 %550
  %552 = vrot.lane.b32.xlu0 %v158, 127
  %v553 = vpop.permute.xlu0 %552
  %554 = vrot.lane.b32.xlu0 %v159, 127
  %v555 = vpop.permute.xlu0 %554
  %556 = vrot.lane.b32.xlu0 %v160, 127
  %v557 = vpop.permute.xlu0 %556
  %558 = vrot.lane.b32.xlu0 %v161, 127
  %v559 = vpop.permute.xlu0 %558
  %560 = vrot.lane.b32.xlu0 %v162, 127
  %v561 = vpop.permute.xlu0 %560
  %562 = vrot.lane.b32.xlu0 %v163, 127
  %v563 = vpop.permute.xlu0 %562
  %v580 = vmul.f32 %v148, %v533
  %v581 = vmul.f32 %v149, %v535
  %v582 = vmul.f32 %v150, %v537
  %v583 = vmul.f32 %v151, %v539
  %v584 = vmul.f32 %v152, %v541
  %v585 = vmul.f32 %v153, %v543
  %v586 = vmul.f32 %v154, %v545
  %v587 = vmul.f32 %v155, %v547
  %v588 = vmul.f32 %v156, %v549
  %v589 = vmul.f32 %v157, %v551
  %v590 = vmul.f32 %v158, %v553
  %v591 = vmul.f32 %v159, %v555
  %v592 = vmul.f32 %v160, %v557
  %v593 = vmul.f32 %v161, %v559
  %v594 = vmul.f32 %v162, %v561
  %v595 = vmul.f32 %v163, %v563
  %612 = vrot.lane.b32.xlu0 %v580, 126
  %v613 = vpop.permute.xlu0 %612
  %614 = vrot.lane.b32.xlu0 %v581, 126
  %v615 = vpop.permute.xlu0 %614
  %616 = vrot.lane.b32.xlu0 %v582, 126
  %v617 = vpop.permute.xlu0 %616
  %618 = vrot.lane.b32.xlu0 %v583, 126
  %v619 = vpop.permute.xlu0 %618
  %620 = vrot.lane.b32.xlu0 %v584, 126
  %v621 = vpop.permute.xlu0 %620
  %622 = vrot.lane.b32.xlu0 %v585, 126
  %v623 = vpop.permute.xlu0 %622
  %624 = vrot.lane.b32.xlu0 %v586, 126
  %v625 = vpop.permute.xlu0 %624
  %626 = vrot.lane.b32.xlu0 %v587, 126
  %v627 = vpop.permute.xlu0 %626
  %628 = vrot.lane.b32.xlu0 %v588, 126
  %v629 = vpop.permute.xlu0 %628
  %630 = vrot.lane.b32.xlu0 %v589, 126
  %v631 = vpop.permute.xlu0 %630
  %632 = vrot.lane.b32.xlu0 %v590, 126
  %v633 = vpop.permute.xlu0 %632
  %634 = vrot.lane.b32.xlu0 %v591, 126
  %v635 = vpop.permute.xlu0 %634
  %636 = vrot.lane.b32.xlu0 %v592, 126
  %v637 = vpop.permute.xlu0 %636
  %638 = vrot.lane.b32.xlu0 %v593, 126
  %v639 = vpop.permute.xlu0 %638
  %640 = vrot.lane.b32.xlu0 %v594, 126
  %v641 = vpop.permute.xlu0 %640
  %642 = vrot.lane.b32.xlu0 %v595, 126
  %v643 = vpop.permute.xlu0 %642
  %v660 = vsub.f32 %v516, %v613
  %v661 = vsub.f32 %v517, %v615
  %v662 = vsub.f32 %v518, %v617
  %v663 = vsub.f32 %v519, %v619
  %v664 = vsub.f32 %v520, %v621
  %v665 = vsub.f32 %v521, %v623
  %v666 = vsub.f32 %v522, %v625
  %v667 = vsub.f32 %v523, %v627
  %v668 = vsub.f32 %v524, %v629
  %v669 = vsub.f32 %v525, %v631
  %v670 = vsub.f32 %v526, %v633
  %v671 = vsub.f32 %v527, %v635
  %v672 = vsub.f32 %v528, %v637
  %v673 = vsub.f32 %v529, %v639
  %v674 = vsub.f32 %v530, %v641
  %v675 = vsub.f32 %v531, %v643
  %692 = vrot.lane.b32.xlu0 %v660, 126
  %v693 = vpop.permute.xlu0 %692
  %694 = vrot.lane.b32.xlu0 %v661, 126
  %v695 = vpop.permute.xlu0 %694
  %696 = vrot.lane.b32.xlu0 %v662, 126
  %v697 = vpop.permute.xlu0 %696
  %698 = vrot.lane.b32.xlu0 %v663, 126
  %v699 = vpop.permute.xlu0 %698
  %700 = vrot.lane.b32.xlu0 %v664, 126
  %v701 = vpop.permute.xlu0 %700
  %702 = vrot.lane.b32.xlu0 %v665, 126
  %v703 = vpop.permute.xlu0 %702
  %704 = vrot.lane.b32.xlu0 %v666, 126
  %v705 = vpop.permute.xlu0 %704
  %706 = vrot.lane.b32.xlu0 %v667, 126
  %v707 = vpop.permute.xlu0 %706
  %708 = vrot.lane.b32.xlu0 %v668, 126
  %v709 = vpop.permute.xlu0 %708
  %710 = vrot.lane.b32.xlu0 %v669, 126
  %v711 = vpop.permute.xlu0 %710
  %712 = vrot.lane.b32.xlu0 %v670, 126
  %v713 = vpop.permute.xlu0 %712
  %714 = vrot.lane.b32.xlu0 %v671, 126
  %v715 = vpop.permute.xlu0 %714
  %716 = vrot.lane.b32.xlu0 %v672, 126
  %v717 = vpop.permute.xlu0 %716
  %718 = vrot.lane.b32.xlu0 %v673, 126
  %v719 = vpop.permute.xlu0 %718
  %720 = vrot.lane.b32.xlu0 %v674, 126
  %v721 = vpop.permute.xlu0 %720
  %722 = vrot.lane.b32.xlu0 %v675, 126
  %v723 = vpop.permute.xlu0 %722
  %v740 = vmul.f32 %v148, %v693
  %v741 = vmul.f32 %v149, %v695
  %v742 = vmul.f32 %v150, %v697
  %v743 = vmul.f32 %v151, %v699
  %v744 = vmul.f32 %v152, %v701
  %v745 = vmul.f32 %v153, %v703
  %v746 = vmul.f32 %v154, %v705
  %v747 = vmul.f32 %v155, %v707
  %v748 = vmul.f32 %v156, %v709
  %v749 = vmul.f32 %v157, %v711
  %v750 = vmul.f32 %v158, %v713
  %v751 = vmul.f32 %v159, %v715
  %v752 = vmul.f32 %v160, %v717
  %v753 = vmul.f32 %v161, %v719
  %v754 = vmul.f32 %v162, %v721
  %v755 = vmul.f32 %v163, %v723
  %772 = vrot.lane.b32.xlu0 %v740, 127
  %v773 = vpop.permute.xlu0 %772
  %774 = vrot.lane.b32.xlu0 %v741, 127
  %v775 = vpop.permute.xlu0 %774
  %776 = vrot.lane.b32.xlu0 %v742, 127
  %v777 = vpop.permute.xlu0 %776
  %778 = vrot.lane.b32.xlu0 %v743, 127
  %v779 = vpop.permute.xlu0 %778
  %780 = vrot.lane.b32.xlu0 %v744, 127
  %v781 = vpop.permute.xlu0 %780
  %782 = vrot.lane.b32.xlu0 %v745, 127
  %v783 = vpop.permute.xlu0 %782
  %784 = vrot.lane.b32.xlu0 %v746, 127
  %v785 = vpop.permute.xlu0 %784
  %786 = vrot.lane.b32.xlu0 %v747, 127
  %v787 = vpop.permute.xlu0 %786
  %788 = vrot.lane.b32.xlu0 %v748, 127
  %v789 = vpop.permute.xlu0 %788
  %790 = vrot.lane.b32.xlu0 %v749, 127
  %v791 = vpop.permute.xlu0 %790
  %792 = vrot.lane.b32.xlu0 %v750, 127
  %v793 = vpop.permute.xlu0 %792
  %794 = vrot.lane.b32.xlu0 %v751, 127
  %v795 = vpop.permute.xlu0 %794
  %796 = vrot.lane.b32.xlu0 %v752, 127
  %v797 = vpop.permute.xlu0 %796
  %798 = vrot.lane.b32.xlu0 %v753, 127
  %v799 = vpop.permute.xlu0 %798
  %800 = vrot.lane.b32.xlu0 %v754, 127
  %v801 = vpop.permute.xlu0 %800
  %802 = vrot.lane.b32.xlu0 %v755, 127
  %v803 = vpop.permute.xlu0 %802
  %v820 = vsub.f32 %v452, %v773
  %v821 = vsub.f32 %v453, %v775
  %v822 = vsub.f32 %v454, %v777
  %v823 = vsub.f32 %v455, %v779
  %v824 = vsub.f32 %v456, %v781
  %v825 = vsub.f32 %v457, %v783
  %v826 = vsub.f32 %v458, %v785
  %v827 = vsub.f32 %v459, %v787
  %v828 = vsub.f32 %v460, %v789
  %v829 = vsub.f32 %v461, %v791
  %v830 = vsub.f32 %v462, %v793
  %v831 = vsub.f32 %v463, %v795
  %v832 = vsub.f32 %v464, %v797
  %v833 = vsub.f32 %v465, %v799
  %v834 = vsub.f32 %v466, %v801
  %v835 = vsub.f32 %v467, %v803
  %836 = vrot.lane.b32.xlu0 %v372, 127
  %v837 = vpop.permute.xlu0 %836
  %838 = vrot.lane.b32.xlu0 %v373, 127
  %v839 = vpop.permute.xlu0 %838
  %840 = vrot.lane.b32.xlu0 %v374, 127
  %v841 = vpop.permute.xlu0 %840
  %842 = vrot.lane.b32.xlu0 %v375, 127
  %v843 = vpop.permute.xlu0 %842
  %844 = vrot.lane.b32.xlu0 %v376, 127
  %v845 = vpop.permute.xlu0 %844
  %846 = vrot.lane.b32.xlu0 %v377, 127
  %v847 = vpop.permute.xlu0 %846
  %848 = vrot.lane.b32.xlu0 %v378, 127
  %v849 = vpop.permute.xlu0 %848
  %850 = vrot.lane.b32.xlu0 %v379, 127
  %v851 = vpop.permute.xlu0 %850
  %852 = vrot.lane.b32.xlu0 %v380, 127
  %v853 = vpop.permute.xlu0 %852
  %854 = vrot.lane.b32.xlu0 %v381, 127
  %v855 = vpop.permute.xlu0 %854
  %856 = vrot.lane.b32.xlu0 %v382, 127
  %v857 = vpop.permute.xlu0 %856
  %858 = vrot.lane.b32.xlu0 %v383, 127
  %v859 = vpop.permute.xlu0 %858
  %860 = vrot.lane.b32.xlu0 %v384, 127
  %v861 = vpop.permute.xlu0 %860
  %862 = vrot.lane.b32.xlu0 %v385, 127
  %v863 = vpop.permute.xlu0 %862
  %864 = vrot.lane.b32.xlu0 %v386, 127
  %v865 = vpop.permute.xlu0 %864
  %866 = vrot.lane.b32.xlu0 %v387, 127
  %v867 = vpop.permute.xlu0 %866
  %v884 = vmul.f32 %v148, %v837
  %v885 = vmul.f32 %v149, %v839
  %v886 = vmul.f32 %v150, %v841
  %v887 = vmul.f32 %v151, %v843
  %v888 = vmul.f32 %v152, %v845
  %v889 = vmul.f32 %v153, %v847
  %v890 = vmul.f32 %v154, %v849
  %v891 = vmul.f32 %v155, %v851
  %v892 = vmul.f32 %v156, %v853
  %v893 = vmul.f32 %v157, %v855
  %v894 = vmul.f32 %v158, %v857
  %v895 = vmul.f32 %v159, %v859
  %v896 = vmul.f32 %v160, %v861
  %v897 = vmul.f32 %v161, %v863
  %v898 = vmul.f32 %v162, %v865
  %v899 = vmul.f32 %v163, %v867
  %916 = vrot.lane.b32.xlu0 %v884, 126
  %v917 = vpop.permute.xlu0 %916
  %918 = vrot.lane.b32.xlu0 %v885, 126
  %v919 = vpop.permute.xlu0 %918
  %920 = vrot.lane.b32.xlu0 %v886, 126
  %v921 = vpop.permute.xlu0 %920
  %922 = vrot.lane.b32.xlu0 %v887, 126
  %v923 = vpop.permute.xlu0 %922
  %924 = vrot.lane.b32.xlu0 %v888, 126
  %v925 = vpop.permute.xlu0 %924
  %926 = vrot.lane.b32.xlu0 %v889, 126
  %v927 = vpop.permute.xlu0 %926
  %928 = vrot.lane.b32.xlu0 %v890, 126
  %v929 = vpop.permute.xlu0 %928
  %930 = vrot.lane.b32.xlu0 %v891, 126
  %v931 = vpop.permute.xlu0 %930
  %932 = vrot.lane.b32.xlu0 %v892, 126
  %v933 = vpop.permute.xlu0 %932
  %934 = vrot.lane.b32.xlu0 %v893, 126
  %v935 = vpop.permute.xlu0 %934
  %936 = vrot.lane.b32.xlu0 %v894, 126
  %v937 = vpop.permute.xlu0 %936
  %938 = vrot.lane.b32.xlu0 %v895, 126
  %v939 = vpop.permute.xlu0 %938
  %940 = vrot.lane.b32.xlu0 %v896, 126
  %v941 = vpop.permute.xlu0 %940
  %942 = vrot.lane.b32.xlu0 %v897, 126
  %v943 = vpop.permute.xlu0 %942
  %944 = vrot.lane.b32.xlu0 %v898, 126
  %v945 = vpop.permute.xlu0 %944
  %946 = vrot.lane.b32.xlu0 %v899, 126
  %v947 = vpop.permute.xlu0 %946
  %v964 = vadd.f32 %v820, %v917
  %v965 = vadd.f32 %v821, %v919
  %v966 = vadd.f32 %v822, %v921
  %v967 = vadd.f32 %v823, %v923
  %v968 = vadd.f32 %v824, %v925
  %v969 = vadd.f32 %v825, %v927
  %v970 = vadd.f32 %v826, %v929
  %v971 = vadd.f32 %v827, %v931
  %v972 = vadd.f32 %v828, %v933
  %v973 = vadd.f32 %v829, %v935
  %v974 = vadd.f32 %v830, %v937
  %v975 = vadd.f32 %v831, %v939
  %v976 = vadd.f32 %v832, %v941
  %v977 = vadd.f32 %v833, %v943
  %v978 = vadd.f32 %v834, %v945
  %v979 = vadd.f32 %v835, %v947
  %vm980 = vcmask 7168
  %v981 = vsel %vm980, %v964, 0.0
  %v982 = vsel %vm980, %v965, 0.0
  %v983 = vadd.f32 %v981, %v982
  %v984 = vsel %vm980, %v966, 0.0
  %v985 = vadd.f32 %v983, %v984
  %v986 = vsel %vm980, %v967, 0.0
  %v987 = vadd.f32 %v985, %v986
  %v988 = vsel %vm980, %v968, 0.0
  %v989 = vadd.f32 %v987, %v988
  %v990 = vsel %vm980, %v969, 0.0
  %v991 = vadd.f32 %v989, %v990
  %v992 = vsel %vm980, %v970, 0.0
  %v993 = vadd.f32 %v991, %v992
  %v994 = vsel %vm980, %v971, 0.0
  %v995 = vadd.f32 %v993, %v994
  %v996 = vrot.slane %v995, 4
  %v997 = vadd.f32 %v995, %v996
  %v998 = vrot.slane %v997, 2
  %v999 = vadd.f32 %v997, %v998
  %v1000 = vrot.slane %v999, 1
  %v1001 = vadd.f32 %v999, %v1000
  %v1002 = vsel %vm980, %v972, 0.0
  %v1003 = vsel %vm980, %v973, 0.0
  %v1004 = vadd.f32 %v1002, %v1003
  %v1005 = vsel %vm980, %v974, 0.0
  %v1006 = vadd.f32 %v1004, %v1005
  %v1007 = vsel %vm980, %v975, 0.0
  %v1008 = vadd.f32 %v1006, %v1007
  %v1009 = vsel %vm980, %v976, 0.0
  %v1010 = vadd.f32 %v1008, %v1009
  %v1011 = vsel %vm980, %v977, 0.0
  %v1012 = vadd.f32 %v1010, %v1011
  %v1013 = vsel %vm980, %v978, 0.0
  %v1014 = vadd.f32 %v1012, %v1013
  %v1015 = vsel %vm980, %v979, 0.0
  %v1016 = vadd.f32 %v1014, %v1015
  %v1017 = vrot.slane %v1016, 4
  %v1018 = vadd.f32 %v1016, %v1017
  %v1019 = vrot.slane %v1018, 2
  %v1020 = vadd.f32 %v1018, %v1019
  %v1021 = vrot.slane %v1020, 1
  %v1022 = vadd.f32 %v1020, %v1021
  %v1023 = vrcp.pop 6.0
  %v1024 = vmul.f32 %v1001, %v1023
  %v1025 = vmul.f32 %v1022, %v1023
  %v1026 = vand.u32 2147483647, %v1024
  %v1027 = vand.u32 2147483647, %v1025
  %v1028 = vmul.f32 %v1026, 985.0
  %v1029 = vmul.f32 %v1027, 985.0
  %1030 = vrot.lane.b32.xlu0 %v148, 125
  %v1031 = vpop.permute.xlu0 %1030
  %1032 = vrot.lane.b32.xlu0 %v156, 125
  %v1033 = vpop.permute.xlu0 %1032
  %v1036 = vadd.f32 %v148, %v1031
  %v1037 = vadd.f32 %v156, %v1033
  %1038 = vrot.lane.b32.xlu0 %v148, 122
  %v1039 = vpop.permute.xlu0 %1038
  %1040 = vrot.lane.b32.xlu0 %v156, 122
  %v1041 = vpop.permute.xlu0 %1040
  %v1044 = vadd.f32 %v1036, %v1039
  %v1045 = vadd.f32 %v1037, %v1041
  %v1046 = vrcp.pop 3.0
  %v1047 = vmul.f32 %v1044, %v1046
  %v1048 = vmul.f32 %v1045, %v1046
  %v1051 = vrot.slane %v1047, 1
  %v1052 = vrot.slane %v1048, 1
  %v1055 = vsub.f32 %v1047, %v1051
  %v1056 = vsub.f32 %v1048, %v1052
  %v1057 = vand.u32 2147483647, %v1055
  %v1058 = vand.u32 2147483647, %v1056
  %v1059 = vmul.f32 %v146, %v146
  %1061 = vrot.lane.b32.xlu0 %v1059, 10
  %v1062 = vpop.permute.xlu0 %1061
  %1065 = vrot.lane.b32.xlu0 %v147, 10
  %v1066 = vpop.permute.xlu0 %1065
  %v1068 = vsel %vm59, %v146, %v1062
  %vm1069 = vcmask 162816
  %v1070 = vsel %vm1069, %v1068, %v1066
  %v1071 = vlaneseq
  %v1072 = vshrl.u32 %v1071, 7
  %v1073 = vsub.s32 1, %v1072
  %v1074 = vrot.slane %v41, %v1073
  %vm1075 = vcmask 556032
  %v1077 = vsel %vm1075, %v1070, 0
  %vm1079 = vcmask 1043456
  %v1081 = vsel %vm1079, %v50, 0
  %1083 = vmatprep.subr.mxu0 0.0
  %1084 = vmatpush1.msra.mxu0 0.0
  %1085 = vmatprep.subr.mxu0 0.0
  %1086 = vmatpush1.msra.mxu0 0.0
  %1087 = vmatprep.subr.mxu0 0.0
  %1088 = vmatpush1.msra.mxu0 0.0
  %1089 = vmatprep.subr.mxu0 0.0
  %1090 = vmatpush1.msra.mxu0 0.0
  %1091 = vmatprep.subr.mxu0 0.0
  %1092 = vmatpush1.msra.mxu0 0.0
  %1093 = vmatprep.subr.mxu0 0.0
  %1094 = vmatpush1.msra.mxu0 0.0
  %1095 = vmatprep.subr.mxu0 0.0
  %1096 = vmatpush1.msra.mxu0 0.0
  %1097 = vmatprep.subr.mxu0 0.0
  %1098 = vmatpush1.msra.mxu0 %v1081
  %1099 = vmatprep.subr.mxu0 0.0
  %1100 = vmatpush1.msra.mxu0 %v49
  %1101 = vmatprep.subr.mxu0 0.0
  %1102 = vmatpush1.msra.mxu0 %v48
  %1103 = vmatprep.subr.mxu0 0.0
  %1104 = vmatpush1.msra.mxu0 %v47
  %1105 = vmatprep.subr.mxu0 0.0
  %1106 = vmatpush1.msra.mxu0 %v46
  %1107 = vmatprep.subr.mxu0 0.0
  %1108 = vmatpush1.msra.mxu0 %v45
  %1109 = vmatprep.subr.mxu0 0.0
  %1110 = vmatpush1.msra.mxu0 %v44
  %1111 = vmatprep.subr.mxu0 0.0
  %1112 = vmatpush1.msra.mxu0 %v43
  %1113 = vmatprep.subr.mxu0 0.0
  %1114 = vmatpush1.msra.mxu0 %v42
  %1115 = vmatprep.subr.mxu0 0.0
  %1116 = vmatpush2.msra.mxu0 0.0
  %1117 = vmatprep.subr.mxu0 0.0
  %1118 = vmatpush2.msra.mxu0 0.0
  %1119 = vmatprep.subr.mxu0 0.0
  %1120 = vmatpush2.msra.mxu0 0.0
  %1121 = vmatprep.subr.mxu0 0.0
  %1122 = vmatpush2.msra.mxu0 0.0
  %1123 = vmatprep.subr.mxu0 0.0
  %1124 = vmatpush2.msra.mxu0 0.0
  %1125 = vmatprep.subr.mxu0 0.0
  %1126 = vmatpush2.msra.mxu0 0.0
  %1127 = vmatprep.subr.mxu0 0.0
  %1128 = vmatpush2.msra.mxu0 0.0
  %1129 = vmatprep.subr.mxu0 0.0
  %1130 = vmatpush2.msra.mxu0 0.0
  %1131 = vmatprep.subr.mxu0 0.0
  %1132 = vmatpush2.msra.mxu0 0.0
  %1133 = vmatprep.subr.mxu0 0.0
  %1134 = vmatpush2.msra.mxu0 0.0
  %1135 = vmatprep.subr.mxu0 0.0
  %1136 = vmatpush2.msra.mxu0 0.0
  %1137 = vmatprep.subr.mxu0 0.0
  %1138 = vmatpush2.msra.mxu0 0.0
  %1139 = vmatprep.subr.mxu0 0.0
  %1140 = vmatpush2.msra.mxu0 0.0
  %1141 = vmatprep.subr.mxu0 0.0
  %1142 = vmatpush2.msra.mxu0 0.0
  %1143 = vmatprep.subr.mxu0 0.0
  %1144 = vmatpush2.msra.mxu0 0.0
  %1145 = vmatprep.subr.mxu0 0.0
  %1146 = vmatpush2.msra.mxu0 0.0
  %1147 = vmatprep.mubr.f32.mxu0 0.0
  %1148 = vmatmul.mubr.f32.gmra.mxu0 %v1077
  %v1149 = vpop.f32.mrf.mxu0
  %v1150 = vadd.f32 %v1074, %v1149
  %v1151 = vpop.f32.mrf.mxu0
  %1152 = vdwg.mxu0
  %v1153 = vmax.f32 %v1150, 0.0
  %v1154 = vmin.f32 %v1153, 5.0
  %vm1157 = vcmask 1041409
  %v1158 = vsel %vm1157, %v1029, %v1028
  %v1162 = vrot.slane %v1058, 7
  %v1163 = vsel %vm1157, %v1162, %v1057
  %1166 = vrot.lane.b32.xlu0 %v1150, 100
  %v1167 = vpop.permute.xlu0 %1166
  %1170 = vrot.lane.b32.xlu0 %v1154, 5
  %v1171 = vpop.permute.xlu0 %1170
  %v1173 = vsel %vm980, %v1158, %v1163
  %vm1174 = vcmask 15360
  %v1175 = vsel %vm1174, %v1173, %v1167
  %vm1176 = vcmask 39936
  %v1177 = vsel %vm1176, %v1175, %v1171
  %v1178 = vsub.f32 %v1177, %v32
  %v1179 = vmul.f32 %v1178, %v1178
  %v1180 = vlaneseq
  %v1181 = vshrl.u32 %v1180, 7
  %v1182 = vsub.s32 2, %v1181
  %v1183 = vrot.slane %v41, %v1182
  %v1184 = vmul.f32 %v1179, %v1183
  %v1185 = vmul.f32 %v1184, %v33
  %v1187 = vrot.slane %v33, 6
  %vm1189 = vcmask 1041408
  %v1190 = vsel %vm1189, %v1185, %v1187
  %vm1191 = vcmask 281600
  %v1192 = vsel %vm1191, %v1190, 0.0
  %1193 = vadd.xlane.f32.xlu0 %v1192
  %v1194 = vpop.xlane.xlu0 %1193
  %v1195 = vsel %vm1189, %v1194, 0.0
  %v1196 = vrot.slane %v1195, 4
  %v1197 = vadd.f32 %v1195, %v1196
  %v1198 = vrot.slane %v1197, 2
  %v1199 = vadd.f32 %v1197, %v1198
  %v1200 = vrot.slane %v1199, 1
  %v1201 = vadd.f32 %v1199, %v1200
  %v1203 = vrot.slane %v1194, 2
  %v1205 = vsel %vm1189, %v1203, 0.0
  %v1206 = vrot.slane %v1205, 4
  %v1207 = vadd.f32 %v1205, %v1206
  %v1208 = vrot.slane %v1207, 2
  %v1209 = vadd.f32 %v1207, %v1208
  %v1210 = vrot.slane %v1209, 1
  %v1211 = vadd.f32 %v1209, %v1210
  %vm1212 = vcmp.gt.f32.partialorder %v33, 0.0
  %v1213 = vsel %vm1212, 1, 0
  %v1214 = vcvt.s32.f32 %v1213
  %vm1215 = vcmask 279552
  %v1216 = vsel %vm1215, %v1214, -inf
  %1217 = vmax.xlane.f32.xlu0 %v1216
  %v1218 = vpop.xlane.xlu0 %1217
  %v1219 = vmul.f32 %v142, %v142
  %v1220 = vmul.f32 %v1219, %v1218
  %vm1221 = vcmask 74752
  %v1222 = vsel %vm1221, %v1220, 0.0
  %1223 = vadd.xlane.f32.xlu0 %v1222
  %v1224 = vpop.xlane.xlu0 %1223
  %v1225 = vsel %vm1189, %v1224, 0.0
  %v1226 = vrot.slane %v1225, 4
  %v1227 = vadd.f32 %v1225, %v1226
  %v1228 = vrot.slane %v1227, 2
  %v1229 = vadd.f32 %v1227, %v1228
  %v1230 = vrot.slane %v1229, 1
  %v1231 = vadd.f32 %v1229, %v1230
  %v1232 = vmul.f32 %v1231, 5e-05
  %v1233 = vsub.f32 %v1057, 3.0
  %v1234 = vsub.f32 %v1058, 3.0
  %v1235 = vmax.f32 %v1233, 0.0
  %v1236 = vmax.f32 %v1234, 0.0
  %v1237 = vmul.f32 %v1235, %v1235
  %v1238 = vmul.f32 %v1236, %v1236
  %v1239 = vsub.f32 0.6, %v1057
  %v1240 = vsub.f32 0.6, %v1058
  %v1241 = vmax.f32 %v1239, 0.0
  %v1242 = vmax.f32 %v1240, 0.0
  %v1243 = vmul.f32 %v1241, %v1241
  %v1244 = vmul.f32 %v1242, %v1242
  %v1245 = vadd.f32 %v1237, %v1243
  %v1246 = vadd.f32 %v1238, %v1244
  %v1247 = vmul.f32 %v1028, 0.01
  %v1248 = vmul.f32 %v1029, 0.01
  %v1249 = vsub.f32 %v1247, 3.0
  %v1250 = vsub.f32 %v1248, 3.0
  %v1251 = vmax.f32 %v1249, 0.0
  %v1252 = vmax.f32 %v1250, 0.0
  %v1253 = vmul.f32 %v1251, %v1251
  %v1254 = vmul.f32 %v1252, %v1252
  %v1255 = vsub.f32 0.3, %v1247
  %v1256 = vsub.f32 0.3, %v1248
  %v1257 = vmax.f32 %v1255, 0.0
  %v1258 = vmax.f32 %v1256, 0.0
  %v1259 = vmul.f32 %v1257, %v1257
  %v1260 = vmul.f32 %v1258, %v1258
  %v1261 = vadd.f32 %v1253, %v1259
  %v1262 = vadd.f32 %v1254, %v1260
  %1265 = vrot.lane.b32.xlu0 %v1261, 1
  %v1266 = vpop.permute.xlu0 %1265
  %1267 = vrot.lane.b32.xlu0 %v1262, 1
  %v1268 = vpop.permute.xlu0 %1267
  %v1271 = vadd.f32 %v1245, %v1266
  %v1272 = vadd.f32 %v1246, %v1268
  %v1275 = vrot.slane %v1272, 7
  %v1276 = vsel %vm1157, %v1275, %v1271
  %vm1278 = vcmask 9224
  %v1279 = vsel %vm1278, %v1276, 0.0
  %v1280 = vrot.slane %v1279, 4
  %v1281 = vadd.f32 %v1279, %v1280
  %v1282 = vrot.slane %v1281, 2
  %v1283 = vadd.f32 %v1281, %v1282
  %v1284 = vrot.slane %v1283, 1
  %v1285 = vadd.f32 %v1283, %v1284
  %v1286 = vrcp.pop 2.0
  %v1287 = vmul.f32 %v1285, %v1286
  %v1288 = vadd.f32 %v1232, %v1287
  %vm1289 = vcmp.gt.f32.partialorder %v1211, 0.0
  %v1290 = vmax.f32 %v1211, 1e-30
  %v1291 = vrcp.pop %v1290
  %v1292 = vmul.f32 %v1201, %v1291
  %v1293 = vadd.f32 %v1292, %v1288
  %v1294 = vsel %vm1289, %v1293, %v1201
  %v1295 = vlaneseq
  %v1296 = vshrl.u32 %v1295, 7
  %v1297 = vsub.s32 0, %v1296
  %v1298 = vrot.slane %v1294, %v1297
  %1300 = vrot.lane.b32.xlu0 %v1298, 34
  %v1301 = vpop.permute.xlu0 %1300
  %vm1303 = vcmask 285696
  %v1304 = vsel %vm1303, %v1177, %v1301
  %vm1305 = vcmask 293888
  %v1306 = vsel %vm1305, %v1304, 0.0
  %1307 = vst [vmem:[%s8] sm:$0x3] %v1306
  // Predicated region
  $region34: #{_shapy_loss_jit.1} parent=0 // pred_check
    _
  $region35: #{_shapy_loss_jit.1} parent=0 // pred_check_branch
    %1309 = sbr.rel (0) target = $region37
  $region36: #{_shapy_loss_jit.1} parent=0 // pred_region
    _
  $region37: #{_shapy_loss_jit.1} parent=0 // pred_fallthru
    _
  // Predicated region
  $region38: #{_shapy_loss_jit.1} parent=0 // pred_check
    _
  $region39: #{_shapy_loss_jit.1} parent=0 // pred_check_branch
    %1311 = sbr.rel (0) target = $region41
  $region40: #{_shapy_loss_jit.1} parent=0 // pred_region
    _
  $region41: #{_shapy_loss_jit.1} parent=0 // pred_fallthru
    _

</llo_original>
